<compile_context>
chip_gen: v5e
topology: v5e:2x2
jax: 0.10.0
libtpu: 0.0.40
codegen_flags: <defaults>
</compile_context>

<pallas_src>
import jax
import jax.numpy as jnp
from jax.experimental import pallas as pl
from jax.experimental.pallas import tpu as pltpu


def _round_up(x, m):
    return (x + m - 1) // m * m


# ---------------------------------------------------------------------------
# Pass 1:  UtX += U^T_tile @ x_tile        (reduction over inner N-tile axis)
# ---------------------------------------------------------------------------
def _utx_kernel(ut_ref, x_ref, acc_ref):
    @pl.when(pl.program_id(1) == 0)
    def _():
        acc_ref[...] = jnp.zeros_like(acc_ref)

    acc_ref[...] += jnp.dot(ut_ref[...], x_ref[...],
                            preferred_element_type=jnp.float32)


# ---------------------------------------------------------------------------
# Pass 2:  UtB += U^T_tile @ relu(U_tile @ A)
# ---------------------------------------------------------------------------
def _resynth_kernel(u_ref, ut_ref, a_ref, acc_ref):
    @pl.when(pl.program_id(1) == 0)
    def _():
        acc_ref[...] = jnp.zeros_like(acc_ref)

    b = jnp.dot(u_ref[...], a_ref[...], preferred_element_type=jnp.float32)
    b = jnp.maximum(b, 0.0)          # relu; dropout == identity in eval mode
    acc_ref[...] += jnp.dot(ut_ref[...], b.astype(ut_ref.dtype),
                            preferred_element_type=jnp.float32)


# ---------------------------------------------------------------------------
# Pass 3:  out_tile = relu(U_tile @ Cf + b_f)        (parallel over N tiles)
# ---------------------------------------------------------------------------
def _fusion_kernel(u_ref, cf_ref, bf_ref, out_ref):
    h = jnp.dot(u_ref[...], cf_ref[...], preferred_element_type=jnp.float32)
    out_ref[...] = jnp.maximum(h + bf_ref[...], 0.0).astype(out_ref.dtype)


def wave_conv_arxiv_forward(x, eigenvector, filter_signals_after,
                            lin_weights, lin_biases, fusion_w, fusion_b,
                            *, block_n=1024, use_bf16_mxu=True, core_split=2):
    """Pallas implementation of Wave_Conv_arxiv.forward (eval mode).

    x:                    [N, dim_h] float32
    eigenvector:          [N, K]     float32
    filter_signals_after: [1, K, T]  float32
    lin_weights[t]:       [dim_h, so_t],  lin_biases[t]: [so_t]
    fusion_w:             [dim_h, dim_h], fusion_b: [dim_h]
    returns               [N, dim_h] float32
    """
    N, dim_h = x.shape
    K = eigenvector.shape[1]
    splits = tuple(int(w.shape[1]) for w in lin_weights)
    assert sum(splits) == dim_h

    # ---- tiny wrapper-side algebra (all [K, D] / [D, D], done once) -------
    w_all = jnp.concatenate(lin_weights, axis=1)            # [D, D]
    b_all = jnp.concatenate(lin_biases, axis=0)[None, :]    # [1, D]
    sig = filter_signals_after[0]                           # [K, T]
    # Per-scale signal expanded into a [K, D] scale matrix (column t of sig
    # repeated splits[t] times) -> the spectral loop fuses into full-width
    # matmuls on [K, D] operands.
    s_mat = jnp.concatenate(
        [jnp.broadcast_to(sig[:, t:t + 1], (K, so))
         for t, so in enumerate(splits)], axis=1)           # [K, D]
    u_colsum = jnp.sum(eigenvector, axis=0)[:, None]        # [K, 1] == U^T 1

    # ---- padding / tiling --------------------------------------------------
    DP = _round_up(dim_h, 128)
    mx = jnp.bfloat16 if use_bf16_mxu else jnp.float32
    mx_bytes = 2 if use_bf16_mxu else 4

    TN = _round_up(max(1, min(block_n, N)), 128)

    # Keep the per-pass VMEM footprint (double-buffered streams + f32
    # intermediates + resident [K, DP] blocks) well under every generation's
    # scoped-VMEM default (v5e: 16 MiB).
    def _footprint(tn):
        p1 = 2 * tn * (DP + K) * mx_bytes
        p2 = 4 * tn * K * mx_bytes + tn * DP * 4
        p3 = 2 * tn * K * mx_bytes + 2 * tn * DP * 4
        return max(p1, p2, p3) + 6 * K * DP * 4
    while TN > 128 and _footprint(TN) > 12 * 1024 * 1024:
        TN = max(128, (TN // 2) // 128 * 128)

    CS = max(1, int(core_split))
    NP = _round_up(N, CS * TN)
    n_tiles = NP // TN
    n_inner = n_tiles // CS

    def pad2(a, rows, cols):
        return jnp.pad(a, ((0, rows - a.shape[0]), (0, cols - a.shape[1])))

    u_pad = pad2(eigenvector, NP, K)                         # zero rows pad
    u_p = u_pad.astype(mx)                                   # [NP, K]
    ut_p = u_pad.T.astype(mx)                                # [K, NP]
    x_p = pad2(x, NP, DP).astype(mx)                         # [NP, DP]

    # ---- block specs (passes 1 & 2: grid = (core_split, n_inner)) ---------
    ut_spec = pl.BlockSpec((K, TN), lambda c, i: (0, c * n_inner + i))
    x_spec = pl.BlockSpec((TN, DP), lambda c, i: (c * n_inner + i, 0))
    u_spec = pl.BlockSpec((TN, K), lambda c, i: (c * n_inner + i, 0))
    kd_res_spec = pl.BlockSpec((K, DP), lambda c, i: (0, 0))   # resident
    part_spec = pl.BlockSpec((None, K, DP), lambda c, i: (c, 0, 0))

    # ---- pass 1: UtX = U^T @ x  (per-core partials) ------------------------
    utx_parts = pl.pallas_call(
        _utx_kernel,
        out_shape=jax.ShapeDtypeStruct((CS, K, DP), jnp.float32),
        grid=(CS, n_inner),
        in_specs=[ut_spec, x_spec],
        out_specs=part_spec,
        compiler_params=pltpu.CompilerParams(
            dimension_semantics=("parallel", "arbitrary")),
    )(ut_p, x_p)
    utx = jnp.sum(utx_parts, axis=0)[:, :dim_h]              # [K, D] f32

    # A = S * (UtX @ W_all + (U^T 1) b_all)   -- tiny [K, D] epilogue (f32)
    a = s_mat * (utx @ w_all + u_colsum * b_all)
    a_p = pad2(a, K, DP).astype(mx)                          # cast once

    # ---- pass 2: UtB = U^T @ relu(U @ A)  (per-core partials) --------------
    utb_parts = pl.pallas_call(
        _resynth_kernel,
        out_shape=jax.ShapeDtypeStruct((CS, K, DP), jnp.float32),
        grid=(CS, n_inner),
        in_specs=[u_spec, ut_spec, kd_res_spec],
        out_specs=part_spec,
        compiler_params=pltpu.CompilerParams(
            dimension_semantics=("parallel", "arbitrary")),
    )(u_p, ut_p, a_p)
    utb = jnp.sum(utb_parts, axis=0)[:, :dim_h]              # [K, D] f32

    # Cf = (S * UtB) @ W_f                    -- tiny [K, D] epilogue (f32)
    cf = (s_mat * utb) @ fusion_w
    cf_p = pad2(cf, K, DP).astype(mx)                        # cast once
    bf_p = pad2(fusion_b[None, :], 1, DP)                    # f32 bias row

    # ---- pass 3: out = relu(U @ Cf + b_f)  -- parallel over N tiles --------
    out = pl.pallas_call(
        _fusion_kernel,
        out_shape=jax.ShapeDtypeStruct((NP, DP), jnp.float32),
        grid=(n_tiles,),
        in_specs=[pl.BlockSpec((TN, K), lambda i: (i, 0)),
                  pl.BlockSpec((K, DP), lambda i: (0, 0)),
                  pl.BlockSpec((1, DP), lambda i: (0, 0))],
        out_specs=pl.BlockSpec((TN, DP), lambda i: (i, 0)),
        compiler_params=pltpu.CompilerParams(
            dimension_semantics=("parallel",)),
    )(u_p, cf_p, bf_p)

    # NOTE: padded rows of `out` hold relu(b_f) != 0; they are sliced off here.
    return out[:N, :dim_h]


def _reference(x, eigenvector, filter_signals_after,
               lin_weights, lin_biases, fusion_w, fusion_b):
    """Pure-JAX replica of the PyTorch forward (eval mode) for checking."""
    U = eigenvector                       # [N, K]
    sig = filter_signals_after[0]         # [K, T]
    parts = []
    for t, (W, b) in enumerate(zip(lin_weights, lin_biases)):
        s = sig[:, t][:, None]            # [K, 1]
        h = x @ W + b                     # [N, so]
        h = U.T @ h
        h = s * h
        h = jax.nn.relu(U @ h)
        h = U.T @ h
        h = s * h
        parts.append(U @ h)
    comb = jnp.concatenate(parts, axis=-1)
    return jax.nn.relu(comb @ fusion_w + fusion_b)


if __name__ == "__main__":
    # Module hyperparameters (act='relu', dropout inactive in eval mode).
    dim_h = 32
    num_J = 3
    t_number = num_J + 1
    single_out = dim_h // t_number                   # 8
    single_out_last = dim_h - num_J * single_out     # 8
    splits = [single_out] * num_J + [single_out_last]

    # Graph sizes: N not a multiple of the node tile (exercises zero-padding)
    # and large enough that block_n=128 gives a real multi-tile reduction
    # (per-core inner accumulation) plus the 2-way core split.
    N = 300   # number of nodes
    K = 8     # number of eigenvectors / spectral modes

    key = jax.random.PRNGKey(0)
    keys = jax.random.split(key, 4 + 2 * t_number)

    x = jax.random.normal(keys[0], (N, dim_h), jnp.float32)
    eigenvector = jax.random.normal(keys[1], (N, K), jnp.float32) / jnp.sqrt(N)
    filter_signals_after = jax.random.uniform(keys[2], (1, K, t_number),
                                              jnp.float32)

    lin_weights, lin_biases = [], []
    for t in range(t_number):
        so = splits[t]
        lin_weights.append(
            jax.random.normal(keys[4 + 2 * t], (dim_h, so), jnp.float32)
            / jnp.sqrt(dim_h))
        lin_biases.append(
            0.01 * jax.random.normal(keys[5 + 2 * t], (so,), jnp.float32))
    fusion_w = jax.random.normal(keys[3], (dim_h, dim_h), jnp.float32) \
        / jnp.sqrt(dim_h)
    fusion_b = jnp.zeros((dim_h,), jnp.float32)

    ref = _reference(x, eigenvector, filter_signals_after,
                     lin_weights, lin_biases, fusion_w, fusion_b)

    # f32 MXU path, small tile -> multi-tile reduction + core split exercised.
    out_f32 = wave_conv_arxiv_forward(x, eigenvector, filter_signals_after,
                                      lin_weights, lin_biases,
                                      fusion_w, fusion_b,
                                      block_n=128, use_bf16_mxu=False)
    out_f32 = jax.block_until_ready(out_f32)
    assert out_f32.shape == (N, dim_h)
    assert jnp.allclose(out_f32, ref, atol=1e-3, rtol=1e-3), \
        "f32 mismatch vs ref"

    # bf16-operand / f32-accumulate MXU path, same small tiling.
    out_bf16 = wave_conv_arxiv_forward(x, eigenvector, filter_signals_after,
                                       lin_weights, lin_biases,
                                       fusion_w, fusion_b,
                                       block_n=128, use_bf16_mxu=True)
    out_bf16 = jax.block_until_ready(out_bf16)
    assert out_bf16.shape == (N, dim_h)
    assert jnp.allclose(out_bf16, ref, atol=5e-2, rtol=5e-2), \
        "bf16 mismatch vs ref"

    # Default configuration (bf16 operands, large node tile).
    out_def = wave_conv_arxiv_forward(x, eigenvector, filter_signals_after,
                                      lin_weights, lin_biases,
                                      fusion_w, fusion_b)
    out_def = jax.block_until_ready(out_def)
    assert out_def.shape == (N, dim_h)
    assert jnp.allclose(out_def, ref, atol=5e-2, rtol=5e-2), \
        "default-config mismatch vs ref"

    print("KERNEL_OK")
</pallas_src>

<mosaic_0001>
module attributes {stable_mosaic.version = 11 : i64} {
  func.func @_utx_kernel(%arg0: i32, %arg1: i32, %arg2: memref<8x128xf32, #tpu.memory_space<vmem>>, %arg3: memref<128x128xf32, #tpu.memory_space<vmem>>, %arg4: memref<1x8x128xf32, #tpu.memory_space<vmem>>) attributes {dimension_semantics = [#tpu.dimension_semantics<parallel>, #tpu.dimension_semantics<arbitrary>], iteration_bounds = array<i64: 2, 2>, scalar_prefetch = 0 : i64, scratch_operands = 0 : i64, tpu.core_type = #tpu.core_type<tc>, window_params = [{transform_indices = @transform_0, window_bounds = array<i64: 8, 128>}, {transform_indices = @transform_1, window_bounds = array<i64: 128, 128>}, {transform_indices = @transform_2, window_bounds = array<i64: 1, 8, 128>}]} {
    %c0_i32 = arith.constant 0 : i32
    %0 = arith.cmpi eq, %arg1, %c0_i32 : i32
    %1 = arith.extui %0 : i1 to i32
    %c0_i32_0 = arith.constant 0 : i32
    %2 = arith.cmpi ne, %1, %c0_i32_0 : i32
    scf.if %2 {
      %cst_10 = arith.constant 0.000000e+00 : f32
      %12 = vector.broadcast %cst_10 : f32 to vector<8x128xf32>
      %c0_11 = arith.constant 0 : index
      %c0_12 = arith.constant 0 : index
      %c0_13 = arith.constant 0 : index
      %13 = vector.load %arg4[%c0_11, %c0_12, %c0_13] : memref<1x8x128xf32, #tpu.memory_space<vmem>>, vector<1x8x128xf32>
      %14 = vector.shape_cast %13 : vector<1x8x128xf32> to vector<8x128xf32>
      %15 = vector.shape_cast %12 : vector<8x128xf32> to vector<1x8x128xf32>
      tpu.vector_store %arg4[%c0_11, %c0_12, %c0_13], %15 {strides = array<i32>} : memref<1x8x128xf32, #tpu.memory_space<vmem>>, vector<1x8x128xf32>,
    } else {
    }
    %c0 = arith.constant 0 : index
    %c0_1 = arith.constant 0 : index
    %c0_2 = arith.constant 0 : index
    %3 = vector.load %arg4[%c0, %c0_1, %c0_2] : memref<1x8x128xf32, #tpu.memory_space<vmem>>, vector<1x8x128xf32>
    %4 = vector.shape_cast %3 : vector<1x8x128xf32> to vector<8x128xf32>
    %c0_3 = arith.constant 0 : index
    %c0_4 = arith.constant 0 : index
    %5 = vector.load %arg2[%c0_3, %c0_4] : memref<8x128xf32, #tpu.memory_space<vmem>>, vector<8x128xf32>
    %c0_5 = arith.constant 0 : index
    %c0_6 = arith.constant 0 : index
    %6 = vector.load %arg3[%c0_5, %c0_6] : memref<128x128xf32, #tpu.memory_space<vmem>>, vector<128x128xf32>
    %cst = arith.constant dense<0.000000e+00> : vector<8x128xf32>
    %7 = tpu.matmul %5, %6, %cst {dimension_numbers = #tpu.dot_dimension_numbers<[1], [0], [0], [1], [0, 0, 1, 1], [], []>} : vector<8x128xf32>, vector<128x128xf32>, vector<8x128xf32> -> vector<8x128xf32>
    %8 = arith.addf %4, %7 : vector<8x128xf32>
    %c0_7 = arith.constant 0 : index
    %c0_8 = arith.constant 0 : index
    %c0_9 = arith.constant 0 : index
    %9 = vector.load %arg4[%c0_7, %c0_8, %c0_9] : memref<1x8x128xf32, #tpu.memory_space<vmem>>, vector<1x8x128xf32>
    %10 = vector.shape_cast %9 : vector<1x8x128xf32> to vector<8x128xf32>
    %11 = vector.shape_cast %8 : vector<8x128xf32> to vector<1x8x128xf32>
    tpu.vector_store %arg4[%c0_7, %c0_8, %c0_9], %11 {strides = array<i32>} : memref<1x8x128xf32, #tpu.memory_space<vmem>>, vector<1x8x128xf32>,
    return
  }
  func.func @transform_0(%arg0: i32, %arg1: i32) -> (i32, i32) {
    %c2_i32 = arith.constant 2 : i32
    %0 = arith.muli %arg0, %c2_i32 : i32
    %1 = arith.addi %0, %arg1 : i32
    %c0_i32 = arith.constant 0 : i32
    %c0_i32_0 = arith.constant 0 : i32
    return %c0_i32, %1 : i32, i32
  }
  func.func @transform_1(%arg0: i32, %arg1: i32) -> (i32, i32) {
    %c2_i32 = arith.constant 2 : i32
    %0 = arith.muli %arg0, %c2_i32 : i32
    %1 = arith.addi %0, %arg1 : i32
    %c0_i32 = arith.constant 0 : i32
    %c0_i32_0 = arith.constant 0 : i32
    return %1, %c0_i32 : i32, i32
  }
  func.func @transform_2(%arg0: i32, %arg1: i32) -> (i32, i32, i32) {
    %c0_i32 = arith.constant 0 : i32
    %c0_i32_0 = arith.constant 0 : i32
    %c0_i32_1 = arith.constant 0 : i32
    return %arg0, %c0_i32, %c0_i32_0 : i32, i32, i32
  }
}

</mosaic_0001>

<llo_original>
// kernel: tpu_custom_call.1
$region0: #{tpu_custom_call.1}
  #allocation0 [shape = 'u32[]', space=smem, size = 0x4, offset = 0x4, fixed_abs, tag = 'smem constant byte address 0x4 - core index']
  #allocation1 [shape = 'u32[72,128]{1,0:T(1,128)}', space=vmem, size = 0x9000, scoped, tag = 'internal scratch']
  %s0 = inlined_call_operand.hbm [shape: f32[8,512], index: 0, kind: input, shape index: {}]
  %s1 = inlined_call_operand.hbm [shape: f32[512,128], index: 1, kind: input, shape index: {}]
  %s2 = inlined_call_operand.hbm [shape: f32[2,8,128], index: 2, kind: output, shape index: {}]
  %s3 = sld [smem:[#allocation0]]
  $region53: #{tpu_custom_call.1} parent=0
    _
  %s5 = ssub.s32 1, %s3
  %s6 = scalar_select 0, %s5, %s3
  $region1: #{tpu_custom_call.1} parent=0
    #allocation2 [shape = 'u8[8192]{0}', space=vmem, size = 0x2000, scoped, tag = 'input window, operand 0']
    #allocation3 [shape = 's32[2]{0}', space=sflag, size = 0x8, scoped, tag = 'scoped memory for tpu_custom_call.1']
    #allocation4 [shape = 's32[2]{0}', space=sflag, size = 0x8, scoped, tag = 'scoped memory for tpu_custom_call.1']
    #allocation5 [shape = 'u8[131072]{0}', space=vmem, size = 0x20000, scoped, tag = 'input window, operand 1']
    #allocation6 [shape = 's32[2]{0}', space=sflag, size = 0x8, scoped, tag = 'scoped memory for tpu_custom_call.1']
    #allocation7 [shape = 'u8[8192]{0}', space=vmem, size = 0x2000, scoped, tag = 'output window, operand 0']
    %7 = vsyncpa [#allocation3], 0
    %s8 = scalar_lea.sflag [#allocation3], 1
    %9 = vsyncpa %s8, 0
    %10 = vsyncpa [#allocation6], 0
    %s11 = scalar_lea.sflag [#allocation6], 1
    %12 = vsyncpa %s11, 0
    %13 = vsyncpa [#allocation4], 0
    %s14 = scalar_lea.sflag [#allocation4], 1
    %15 = vsyncpa %s14, 0
    loop: start=0, step=1, limit=6
    $region2: #{tpu_custom_call.1} parent=1 // loop_pre_header
      _
    $region3: #{tpu_custom_call.1} parent=1 // loop_header
      %s17 = sphi 0, %s21
      %p18 = scmp.ge.s32.totalorder %s17, 6
      %s24 = sphi 0, %s36
      %s25 = sphi 0, %s32
      %s26 = sphi 0, %s24
      %s27 = sphi 0, %s25
      %s28 = sphi 0, %s26
      %s29 = sphi 0, %s27
      %s43 = sphi 0, %s45
      %s46 = sphi 0, %s43
      %s47 = sphi 0, %s46
      %s63 = sphi 0, %s47
      %s73 = sphi 0, %s75
      %s76 = sphi 0, %s73
      %s77 = sphi 0, %s76
      %s93 = sphi 0, %s77
      %s99 = sphi 0, %s101
      %s102 = sphi 0, %s99
      %s103 = sphi 0, %s102
      %s119 = sphi 0, %s103
    $region4: #{tpu_custom_call.1} parent=1 // loop_header_branch
      %20 = sbr.rel (%p18) target = $region8
    $region5: #{tpu_custom_call.1} parent=1 // loop_body
      %s22 = ssub.s32 %s17, 1
      %s23 = ssub.s32 %s17, 2
      %s30 = sadd.s32 1, %s25
      %p31 = scmp.ge.s32.totalorder %s30, 2
      %s32 = scalar_select %p31, 0, %s30
      %s33 = sadd.s32 1, %s24
      %s34 = scalar_select %p31, %s33, %s24
      %p35 = scmp.ge.s32.totalorder %s34, 2
      %s36 = scalar_select %p35, 0, %s34
      %s37 = smul.u32 %s24, 2
      %s38 = sadd.s32 %s37, %s25
      %s39 = smul.u32 %s36, 2
      %s40 = sadd.s32 %s39, %s32
      %s41 = ssub.s32 %s38, %s40
      %p42 = scmp.eq.s32.totalorder %s41, 0
      %s44 = sadd.s32 %s43, 1
      %s45 = scalar_select %p42, %s43, %s44
      %p48 = pneg %p42
      %p49 = scmp.eq.s32.totalorder %s17, 3
      %p50 = por %p48, %p49
      %p51 = scmp.ne.s32.totalorder %s43, %s46
      %p52 = scmp.eq.s32.totalorder %s17, 0
      %p53 = por %p51, %p52
      %p54 = scmp.ne.s32.totalorder %s43, %s46
      %p55 = scmp.eq.s32.totalorder %s22, 3
      %p56 = por %p54, %p55
      %p57 = scmp.ne.s32.totalorder %s46, %s47
      %p58 = scmp.eq.s32.totalorder %s22, 0
      %p59 = por %p57, %p58
      %p60 = scmp.ne.s32.totalorder %s46, %s47
      %p61 = scmp.eq.s32.totalorder %s23, 3
      %p62 = por %p60, %p61
      %p64 = scmp.ne.s32.totalorder %s47, %s63
      %p65 = scmp.eq.s32.totalorder %s23, 0
      %p66 = por %p64, %p65
      %s67 = smul.u32 %s24, 2
      %s68 = sadd.s32 %s67, %s25
      %s69 = smul.u32 %s36, 2
      %s70 = sadd.s32 %s69, %s32
      %s71 = ssub.s32 %s68, %s70
      %p72 = scmp.eq.s32.totalorder %s71, 0
      %s74 = sadd.s32 %s73, 1
      %s75 = scalar_select %p72, %s73, %s74
      %p78 = pneg %p72
      %p79 = scmp.eq.s32.totalorder %s17, 3
      %p80 = por %p78, %p79
      %p81 = scmp.ne.s32.totalorder %s73, %s76
      %p82 = scmp.eq.s32.totalorder %s17, 0
      %p83 = por %p81, %p82
      %p84 = scmp.ne.s32.totalorder %s73, %s76
      %p85 = scmp.eq.s32.totalorder %s22, 3
      %p86 = por %p84, %p85
      %p87 = scmp.ne.s32.totalorder %s76, %s77
      %p88 = scmp.eq.s32.totalorder %s22, 0
      %p89 = por %p87, %p88
      %p90 = scmp.ne.s32.totalorder %s76, %s77
      %p91 = scmp.eq.s32.totalorder %s23, 3
      %p92 = por %p90, %p91
      %p94 = scmp.ne.s32.totalorder %s77, %s93
      %p95 = scmp.eq.s32.totalorder %s23, 0
      %p96 = por %p94, %p95
      %s97 = ssub.s32 %s24, %s36
      %p98 = scmp.eq.s32.totalorder %s97, 0
      %s100 = sadd.s32 %s99, 1
      %s101 = scalar_select %p98, %s99, %s100
      %p104 = pneg %p98
      %p105 = scmp.eq.s32.totalorder %s17, 3
      %p106 = por %p104, %p105
      %p107 = scmp.ne.s32.totalorder %s99, %s102
      %p108 = scmp.eq.s32.totalorder %s17, 0
      %p109 = por %p107, %p108
      %p110 = scmp.ne.s32.totalorder %s99, %s102
      %p111 = scmp.eq.s32.totalorder %s22, 3
      %p112 = por %p110, %p111
      %p113 = scmp.ne.s32.totalorder %s102, %s103
      %p114 = scmp.eq.s32.totalorder %s22, 0
      %p115 = por %p113, %p114
      %p116 = scmp.ne.s32.totalorder %s102, %s103
      %p117 = scmp.eq.s32.totalorder %s23, 3
      %p118 = por %p116, %p117
      %p120 = scmp.ne.s32.totalorder %s103, %s119
      %p121 = scmp.eq.s32.totalorder %s23, 0
      %p122 = por %p120, %p121
      %p123 = scmp.le.s32.totalorder 1, %s17
      %p124 = scmp.lt.s32.totalorder %s17, 5
      %p125 = pnand %p123, %p124
      %p126 = pneg %p125
      // Predicated region
      $region9: #{tpu_custom_call.1} parent=5 // pred_check
        _
      $region10: #{tpu_custom_call.1} parent=5 // pred_check_branch
        %128 = sbr.rel (%p125) target = $region12
      $region11: #{tpu_custom_call.1} parent=5 // pred_region
        %s129 = ssub.s32 %s17, 1
      $region12: #{tpu_custom_call.1} parent=5 // pred_fallthru
        _
      %p130 = scmp.lt.s32.totalorder %s17, 4
      // Predicated region
      $region13: #{tpu_custom_call.1} parent=5 // pred_check
        %p131 = pneg %p130
      $region14: #{tpu_custom_call.1} parent=5 // pred_check_branch
        %133 = sbr.rel (%p131) target = $region16
      $region15: #{tpu_custom_call.1} parent=5 // pred_region
        // Predicated region
        $region17: #{tpu_custom_call.1} parent=15 // pred_check
          %p134 = pneg %p53
        $region18: #{tpu_custom_call.1} parent=15 // pred_check_branch
          %136 = sbr.rel (%p134) target = $region20
        $region19: #{tpu_custom_call.1} parent=15 // pred_region
          %s137 = sand.u32 %s43, 1
          %s138 = scalar_lea.sflag [#allocation3], %s137
          %s139 = sand.u32 %s43, 1
          %s140 = smul.addr %s139, 8
          %s141 = scalar_lea.vmem [#allocation2], %s140
          %s142 = smul.u32 %s24, 2
          %s143 = sadd.s32 %s142, %s25
          %145 = vsyncadd %s138, 0
          %s146 = smul.addr %s143, 8
          %s147 = scalar_lea.hbm %s0, %s146
          %s149 = sshll.u32 %s147, 4
          %s150 = int_to_ptr.hbm [resolvable:$true] %s149
          %s151 = sshll.u32 %s141, 4
          %s152 = int_to_ptr.vmem [resolvable:$true] %s151
          %154 = dma.hbm_to_vmem [thread:$0]  %s150, 128, %s152, %s138
        $region20: #{tpu_custom_call.1} parent=15 // pred_fallthru
          _
        // Predicated region
        $region21: #{tpu_custom_call.1} parent=15 // pred_check
          %p155 = pneg %p83
        $region22: #{tpu_custom_call.1} parent=15 // pred_check_branch
          %157 = sbr.rel (%p155) target = $region24
        $region23: #{tpu_custom_call.1} parent=15 // pred_region
          %s158 = sand.u32 %s73, 1
          %s159 = scalar_lea.sflag [#allocation6], %s158
          %s160 = sand.u32 %s73, 1
          %s161 = smul.addr %s160, 128
          %s162 = scalar_lea.vmem [#allocation5], %s161
          %s163 = smul.u32 %s24, 2
          %s164 = sadd.s32 %s163, %s25
          %s165 = smul.u32 16, %s164
          %167 = vsyncadd %s159, 0
          %s168 = smul.addr %s165, 8
          %s169 = scalar_lea.hbm %s1, %s168
          %s170 = sshll.u32 %s169, 4
          %s171 = int_to_ptr.hbm [resolvable:$true] %s170
          %s172 = sshll.u32 %s162, 4
          %s173 = int_to_ptr.vmem [resolvable:$true] %s172
          %178 = dma.hbm_to_vmem [thread:$0]  %s171, 2048, %s173, %s159, 128, 128, 8
        $region24: #{tpu_custom_call.1} parent=15 // pred_fallthru
          _
      $region16: #{tpu_custom_call.1} parent=5 // pred_fallthru
        _
      %p179 = scmp.le.s32.totalorder 1, %s17
      %p180 = scmp.lt.s32.totalorder %s17, 5
      %p181 = pnand %p179, %p180
      %p182 = pneg %p181
      // Predicated region
      $region25: #{tpu_custom_call.1} parent=5 // pred_check
        _
      $region26: #{tpu_custom_call.1} parent=5 // pred_check_branch
        %184 = sbr.rel (%p181) target = $region28
      $region27: #{tpu_custom_call.1} parent=5 // pred_region
        %s185 = ssub.s32 %s17, 1
        %s186 = sand.u32 %s46, 1
        %s187 = scalar_lea.sflag [#allocation3], %s186
        %s188 = sand.u32 %s46, 1
        %s189 = smul.addr %s188, 8
        %s190 = scalar_lea.vmem [#allocation2], %s189
        // Predicated region
        $region29: #{tpu_custom_call.1} parent=27 // pred_check
          %p191 = pneg %p59
        $region30: #{tpu_custom_call.1} parent=27 // pred_check_branch
          %193 = sbr.rel (%p191) target = $region32
        $region31: #{tpu_custom_call.1} parent=27 // pred_region
          %195 = dma.done %s187, 128
        $region32: #{tpu_custom_call.1} parent=27 // pred_fallthru
          _
        %s196 = sand.u32 %s76, 1
        %s197 = scalar_lea.sflag [#allocation6], %s196
        %s198 = sand.u32 %s76, 1
        %s199 = smul.addr %s198, 128
        %s200 = scalar_lea.vmem [#allocation5], %s199
        // Predicated region
        $region33: #{tpu_custom_call.1} parent=27 // pred_check
          %p201 = pneg %p89
        $region34: #{tpu_custom_call.1} parent=27 // pred_check_branch
          %203 = sbr.rel (%p201) target = $region36
        $region35: #{tpu_custom_call.1} parent=27 // pred_region
          %205 = dma.done %s197, 2048
        $region36: #{tpu_custom_call.1} parent=27 // pred_fallthru
          _
        %s206 = sand.u32 %s46, 1
        %s207 = scalar_lea.sflag [#allocation3], %s206
        %s208 = sand.u32 %s46, 1
        %s209 = smul.addr %s208, 8
        %s210 = scalar_lea.vmem [#allocation2], %s209
        %p211 = pneg %p59
        %p212 = pneg %p56
        %s213 = sand.u32 %s76, 1
        %s214 = scalar_lea.sflag [#allocation6], %s213
        %s215 = sand.u32 %s76, 1
        %s216 = smul.addr %s215, 128
        %s217 = scalar_lea.vmem [#allocation5], %s216
        %p218 = pneg %p89
        %p219 = pneg %p86
        %p220 = pneg %p115
        %p221 = pneg %p112
        %s222 = sand.u32 %s102, 1
        %s223 = scalar_lea.sflag [#allocation4], %s222
        %s224 = sand.u32 %s102, 1
        %s225 = smul.addr %s224, 8
        %s226 = scalar_lea.vmem [#allocation7], %s225
        %s227 = smul.u32 %s26, 2
        %s228 = sadd.s32 %s227, %s27
        %s229 = smul.u32 %s26, 2
        %s230 = sadd.s32 %s229, %s27
        %s231 = smul.u32 16, %s230
        %p232 = scmp.eq.s32.totalorder %s27, 0
        // Predicated region
        $region37: #{tpu_custom_call.1} parent=27 // pred_check
          %p233 = pneg %p232
        $region38: #{tpu_custom_call.1} parent=27 // pred_check_branch
          %235 = sbr.rel (%p233) target = $region40
        $region39: #{tpu_custom_call.1} parent=27 // pred_region
          %236 = vst [vmem:[%s226] sm:$0xff] 0.0
        $region40: #{tpu_custom_call.1} parent=27 // pred_fallthru
          _
        %v237 = vld [vmem:[%s226] sm:$0xff]
        %v238 = vld [vmem:[%s190] sm:$0xff]
        %v239 = vld [vmem:[%s200] sm:$0xff]
        %v240 = vld [vmem:[%s200 + $0x8] sm:$0xff]
        %v241 = vld [vmem:[%s200 + $0x10] sm:$0xff]
        %v242 = vld [vmem:[%s200 + $0x18] sm:$0xff]
        %v243 = vld [vmem:[%s200 + $0x20] sm:$0xff]
        %v244 = vld [vmem:[%s200 + $0x28] sm:$0xff]
        %v245 = vld [vmem:[%s200 + $0x30] sm:$0xff]
        %v246 = vld [vmem:[%s200 + $0x38] sm:$0xff]
        %v247 = vld [vmem:[%s200 + $0x40] sm:$0xff]
        %v248 = vld [vmem:[%s200 + $0x48] sm:$0xff]
        %v249 = vld [vmem:[%s200 + $0x50] sm:$0xff]
        %v250 = vld [vmem:[%s200 + $0x58] sm:$0xff]
        %v251 = vld [vmem:[%s200 + $0x60] sm:$0xff]
        %v252 = vld [vmem:[%s200 + $0x68] sm:$0xff]
        %v253 = vld [vmem:[%s200 + $0x70] sm:$0xff]
        %v254 = vld [vmem:[%s200 + $0x78] sm:$0xff]
        %255 = vmatpush.msra.mxu0 %v254
        %256 = vmatpush.msra.mxu0 %v253
        %257 = vmatpush.msra.mxu0 %v252
        %258 = vmatpush.msra.mxu0 %v251
        %259 = vmatpush.msra.mxu0 %v250
        %260 = vmatpush.msra.mxu0 %v249
        %261 = vmatpush.msra.mxu0 %v248
        %262 = vmatpush.msra.mxu0 %v247
        %263 = vmatpush.msra.mxu0 %v246
        %264 = vmatpush.msra.mxu0 %v245
        %265 = vmatpush.msra.mxu0 %v244
        %266 = vmatpush.msra.mxu0 %v243
        %267 = vmatpush.msra.mxu0 %v242
        %268 = vmatpush.msra.mxu0 %v241
        %269 = vmatpush.msra.mxu0 %v240
        %270 = vmatpush.msra.mxu0 %v239
        %271 = vmatmul.f32.gmra.mxu0 %v238
        %v272 = vpop.f32.mrf.mxu0
        %v273 = vadd.f32 0.0, %v272
        %274 = vdwg.mxu0
        %v275 = vadd.f32 %v237, %v273
        %276 = vst [vmem:[%s226] sm:$0xff] %v275
        %s277 = sand.u32 %s102, 1
        %s278 = scalar_lea.sflag [#allocation4], %s277
        %s279 = sand.u32 %s102, 1
        %s280 = smul.addr %s279, 8
        %s281 = scalar_lea.vmem [#allocation7], %s280
        // Predicated region
        $region41: #{tpu_custom_call.1} parent=27 // pred_check
          %p282 = pneg %p112
        $region42: #{tpu_custom_call.1} parent=27 // pred_check_branch
          %284 = sbr.rel (%p282) target = $region44
        $region43: #{tpu_custom_call.1} parent=27 // pred_region
          %286 = vsyncadd %s278, 0
          %s287 = smul.addr %s26, 8
          %s288 = scalar_lea.hbm %s2, %s287
          %s290 = sshll.u32 %s281, 4
          %s291 = int_to_ptr.vmem [resolvable:$true] %s290
          %s292 = sshll.u32 %s288, 4
          %s293 = int_to_ptr.hbm [resolvable:$true] %s292
          %295 = dma.vmem_to_hbm [thread:$0]  %s291, 128, %s293, %s278
        $region44: #{tpu_custom_call.1} parent=27 // pred_fallthru
          _
      $region28: #{tpu_custom_call.1} parent=5 // pred_fallthru
        _
      %p296 = scmp.le.s32.totalorder 2, %s17
      // Predicated region
      $region45: #{tpu_custom_call.1} parent=5 // pred_check
        %p297 = pneg %p296
      $region46: #{tpu_custom_call.1} parent=5 // pred_check_branch
        %299 = sbr.rel (%p297) target = $region48
      $region47: #{tpu_custom_call.1} parent=5 // pred_region
        %s300 = ssub.s32 %s17, 2
        // Predicated region
        $region49: #{tpu_custom_call.1} parent=47 // pred_check
          %p301 = pneg %p118
        $region50: #{tpu_custom_call.1} parent=47 // pred_check_branch
          %303 = sbr.rel (%p301) target = $region52
        $region51: #{tpu_custom_call.1} parent=47 // pred_region
          %s304 = sand.u32 %s103, 1
          %s305 = scalar_lea.sflag [#allocation4], %s304
          %s306 = sand.u32 %s103, 1
          %s307 = smul.addr %s306, 8
          %s308 = scalar_lea.vmem [#allocation7], %s307
          %310 = dma.done %s305, 128
        $region52: #{tpu_custom_call.1} parent=47 // pred_fallthru
          _
      $region48: #{tpu_custom_call.1} parent=5 // pred_fallthru
        _
    $region6: #{tpu_custom_call.1} parent=1 // loop_footer
      %s21 = sadd.s32 1, %s17
    $region7: #{tpu_custom_call.1} parent=1 // loop_footer_branch
      %16 = sbr.rel target = $region3
    $region8: #{tpu_custom_call.1} parent=1 // loop_exit
      _
    %311 = vsyncpa [#allocation3], 1
    %s312 = scalar_lea.sflag [#allocation3], 1
    %313 = vsyncpa %s312, 1
    %314 = vsyncpa [#allocation6], 1
    %s315 = scalar_lea.sflag [#allocation6], 1
    %316 = vsyncpa %s315, 1
    %317 = vsyncpa [#allocation4], 1
    %s318 = scalar_lea.sflag [#allocation4], 1
    %319 = vsyncpa %s318, 1

</llo_original>
